<compile_context>
chip_gen: v6e
topology: v6e:2x2x1
jax: 0.10.0
libtpu: 0.0.40
codegen_flags: <defaults>
</compile_context>

<pallas_src>
import math
from typing import NamedTuple, List, Tuple

import jax
import jax.numpy as jnp
import numpy as np
from jax.experimental import pallas as pl
from jax.experimental.pallas import tpu as pltpu


# ----------------------------------------------------------------------------
# Module configuration (concrete instantiation of TensorProduct)
# ----------------------------------------------------------------------------
class Instruction(NamedTuple):
    i_in1: int
    i_in2: int
    i_out: int
    connection_mode: str
    has_weight: bool
    path_weight: float
    path_shape: tuple


# (mul, rep.dim) pairs
IRREPS_IN1: List[Tuple[int, int]] = [(4, 1), (4, 3)]   # 4x scalar + 4x vector -> dim 16
IRREPS_IN2: List[Tuple[int, int]] = [(4, 1), (4, 3)]   # dim 16
IRREPS_OUT: List[Tuple[int, int]] = [(8, 1), (8, 3)]   # dim 32

RAW_INSTRUCTIONS = [
    (0, 0, 0, "uvw", True, 1.0),
    (1, 1, 0, "uvw", True, 1.0),
    (0, 1, 1, "uvw", True, 1.0),
    (1, 0, 1, "uvw", True, 1.0),
    (1, 1, 1, "uvw", True, 1.0),
]

IN1_DIM = sum(m * d for m, d in IRREPS_IN1)
IN2_DIM = sum(m * d for m, d in IRREPS_IN2)
OUT_DIM = sum(m * d for m, d in IRREPS_OUT)


def _round_up(a: int, m: int) -> int:
    return ((a + m - 1) // m) * m


def _offsets(irreps):
    offs, o = [], 0
    for m, d in irreps:
        offs.append(o)
        o += m * d
    return offs


OFF1, OFF2, OFFO = _offsets(IRREPS_IN1), _offsets(IRREPS_IN2), _offsets(IRREPS_OUT)


def build_instructions():
    """Mirror TensorProduct.__init__ (irrep_normalization='component',
    path_normalization='element', all variances 1.0)."""
    ins_list = []
    for (i1, i2, io, mode, hw, pw) in RAW_INSTRUCTIONS:
        assert mode == "uvw"
        path_shape = (IRREPS_IN1[i1][0], IRREPS_IN2[i2][0], IRREPS_OUT[io][0])
        ins_list.append(Instruction(i1, i2, io, mode, hw, pw, path_shape))

    def num_elements(ins):
        return IRREPS_IN1[ins.i_in1][0] * IRREPS_IN2[ins.i_in2][0]  # 'uvw'

    out = []
    for ins in ins_list:
        alpha = float(IRREPS_OUT[ins.i_out][1])                      # 'component'
        x = sum(1.0 * 1.0 * num_elements(i) for i in ins_list        # 'element'
                if i.i_out == ins.i_out)
        if x > 0.0:
            alpha /= x
        alpha *= 1.0                 # out_var
        alpha *= ins.path_weight
        out.append(Instruction(ins.i_in1, ins.i_in2, ins.i_out, ins.connection_mode,
                               ins.has_weight, math.sqrt(alpha), ins.path_shape))
    return out


INSTRUCTIONS = build_instructions()
WEIGHT_NUMEL = sum(int(np.prod(ins.path_shape)) for ins in INSTRUCTIONS if ins.has_weight)


def make_cg_dict(key):
    """Deterministic Clebsch-Gordan-like buffers, one per (i_in1, i_in2, i_out).
    # TODO(synk): real module uses lie.clebsch_gordan(...).sum(0); `lie` is not
    # available here, so CG buffers are synthetic deterministic constants."""
    cg = {}
    seen = []
    for ins in INSTRUCTIONS:
        k = (ins.i_in1, ins.i_in2, ins.i_out)
        if k in seen:
            continue
        seen.append(k)
        d1 = IRREPS_IN1[k[0]][1]
        d2 = IRREPS_IN2[k[1]][1]
        d3 = IRREPS_OUT[k[2]][1]
        key, sub = jax.random.split(key)
        cg[k] = jax.random.normal(sub, (d1, d2, d3), dtype=jnp.float32)
    return cg, key


def fold_to_bilinear(weight_flat, cg_dict):
    """Fold weights + CG + normalization into one 2D MXU operand
    T2 of shape (IN1_DIM * IN2_DIM, OUT_DIM) = (256, 32).  No lane padding:
    the kernel writes the 32 real output columns straight to HBM."""
    T = jnp.zeros((IN1_DIM, IN2_DIM, OUT_DIM), dtype=jnp.float32)
    flat = 0
    for ins in INSTRUCTIONS:
        m1, d1 = IRREPS_IN1[ins.i_in1]
        m2, d2 = IRREPS_IN2[ins.i_in2]
        mo, do = IRREPS_OUT[ins.i_out]
        psize = int(np.prod(ins.path_shape))
        w = weight_flat[flat:flat + psize].reshape(m1, m2, mo)
        flat += psize
        cg = cg_dict[(ins.i_in1, ins.i_in2, ins.i_out)]
        # out[z, w*do+k] += pw * W[u,v,w] * CG[i,j,k] * x1[z,u*d1+i] * x2[z,v*d2+j]
        M = ins.path_weight * jnp.einsum("uvw,ijk->uivjwk", w, cg)
        M = M.reshape(m1 * d1, m2 * d2, mo * do)
        T = T.at[OFF1[ins.i_in1]:OFF1[ins.i_in1] + m1 * d1,
                 OFF2[ins.i_in2]:OFF2[ins.i_in2] + m2 * d2,
                 OFFO[ins.i_out]:OFFO[ins.i_out] + mo * do].add(M)
    # Row index a*IN2_DIM + b matches the in-kernel Khatri-Rao lane order.
    return T.reshape(IN1_DIM * IN2_DIM, OUT_DIM)


# ----------------------------------------------------------------------------
# Pallas kernel: per batch tile
#   xy[z, a*D2 + b] = x[z, a] * y[z, b]          (Khatri-Rao, VPU)
#   out[z, :]       = xy[z, :] @ T2              (single MXU matmul, K=256, N=32)
# ----------------------------------------------------------------------------
def _choose_tile(B: int, tile_b: int) -> int:
    """Batch rows per grid step: multiple of 8 (sublane rule) and, for B > 8,
    small enough that the grid has >= 2 steps (so v7x's two TensorCores both
    get work via the 'parallel' batch axis)."""
    tile_b = max(8, (tile_b // 8) * 8)
    if B <= 8:
        return B                       # block == full array dim (legal), 1 step
    half = _round_up(pl.cdiv(B, 2), 8)
    eff = min(tile_b, half)
    return max(8, (eff // 8) * 8)


def tensor_product_pallas(x, y, T2, *, tile_b=2048, compute_dtype=jnp.float32):
    """x: (B, 16), y: (B, 16), T2: (256, 32) -> out (B, 32).

    compute_dtype: dtype of the MXU operands.  f32 (default) keeps the 2e-4
    accuracy; jnp.bfloat16 is the v5e perf knob (single-pass MXU) and requires
    a relaxed tolerance (~1e-2).  Accumulation is always f32.
    """
    B, D1 = x.shape
    B2, D2 = y.shape
    assert B == B2
    KR, DO = T2.shape
    assert KR == D1 * D2 and DO == OUT_DIM

    eff = _choose_tile(B, tile_b)
    grid = (pl.cdiv(B, eff),)   # no wrapper pad: Pallas masks the ragged last block

    def kernel(x1_ref, x2_ref, t_ref, o_ref):
        x1 = x1_ref[...]                                   # (eff, D1) f32
        x2 = x2_ref[...]                                   # (eff, D2) f32
        # Khatri-Rao on the VPU, lane order a*D2 + b (== repeat(x1,D2) * tile(x2,D1)).
        # Kept on VPU/XLU: in f32 the K=256 matmul below is already the binding
        # MXU cost, so moving this to one-hot E-matmuls would only pay off
        # together with bf16 operands.
        xy = (jnp.broadcast_to(x1[:, :, None], (eff, D1, D2)) *
              jnp.broadcast_to(x2[:, None, :], (eff, D1, D2))).reshape(eff, D1 * D2)
        lhs = xy.astype(compute_dtype)
        rhs = t_ref[...].astype(compute_dtype)
        # Single full-depth MXU matmul: (eff, 256) @ (256, 32), f32 accumulation.
        o_ref[...] = jnp.dot(lhs, rhs,
                             preferred_element_type=jnp.float32).astype(o_ref.dtype)

    out = pl.pallas_call(
        kernel,
        # Slim output: only the 32 real columns go to HBM (block last dim ==
        # full array dim, so the (8,128) rule is satisfied; HBM side of the
        # output DMA is fully contiguous since the block covers whole rows).
        out_shape=jax.ShapeDtypeStruct((B, DO), x.dtype),
        grid_spec=pltpu.PrefetchScalarGridSpec(
            num_scalar_prefetch=0,
            grid=grid,
            in_specs=[
                pl.BlockSpec((eff, D1), lambda i: (i, 0)),
                pl.BlockSpec((eff, D2), lambda i: (i, 0)),
                # T2 is tiny (256 x 32 f32 = 32 KiB); constant index -> held
                # resident in VMEM across grid steps (double-buffer waste is
                # only 64 KiB now, so no need for Buffered(1)).
                pl.BlockSpec((KR, DO), lambda i: (0, 0)),
            ],
            out_specs=pl.BlockSpec((eff, DO), lambda i: (i, 0)),
        ),
        compiler_params=pltpu.CompilerParams(
            dimension_semantics=("parallel",)),
    )(x, y, T2)

    return out   # no trailing slice: shape is already (B, OUT_DIM)


# ----------------------------------------------------------------------------
# Pure-JAX reference (mirrors codegen_tensor_product_left_right per-instruction)
# ----------------------------------------------------------------------------
def reference_forward(x, y, weight_flat, cg_dict):
    B = x.shape[0]
    out_slices = [jnp.zeros((B, m * d), jnp.float32) for (m, d) in IRREPS_OUT]
    flat = 0
    for ins in INSTRUCTIONS:
        m1, d1 = IRREPS_IN1[ins.i_in1]
        m2, d2 = IRREPS_IN2[ins.i_in2]
        mo, do = IRREPS_OUT[ins.i_out]
        x1 = x[:, OFF1[ins.i_in1]:OFF1[ins.i_in1] + m1 * d1].reshape(B, m1, d1)
        x2 = y[:, OFF2[ins.i_in2]:OFF2[ins.i_in2] + m2 * d2].reshape(B, m2, d2)
        psize = int(np.prod(ins.path_shape))
        w = weight_flat[flat:flat + psize].reshape(m1, m2, mo)
        flat += psize
        cg = cg_dict[(ins.i_in1, ins.i_in2, ins.i_out)]
        xx = jnp.einsum("zui,zvj->zuvij", x1, x2)
        res = jnp.einsum("uvw,ijk,zuvij->zwk", w, cg, xx)
        res = ins.path_weight * res
        out_slices[ins.i_out] = out_slices[ins.i_out] + res.reshape(B, mo * do)
    return jnp.concatenate(out_slices, axis=1)


# ----------------------------------------------------------------------------
if __name__ == "__main__":
    key = jax.random.PRNGKey(0)

    # deterministic "internal" weight (torch.randn(weight_numel) analogue)
    key, wkey = jax.random.split(key)
    weight = jax.random.normal(wkey, (WEIGHT_NUMEL,), dtype=jnp.float32)

    # deterministic CG buffers
    cg_dict, key = make_cg_dict(key)

    # inputs: (..., irreps_in1.dim) / (..., irreps_in2.dim)
    B = 16
    key, xkey, ykey = jax.random.split(key, 3)
    x = jax.random.normal(xkey, (B, IN1_DIM), dtype=jnp.float32)
    y = jax.random.normal(ykey, (B, IN2_DIM), dtype=jnp.float32)

    # fold instruction weights/CG/normalization into one 2D bilinear operand (glue)
    T2 = fold_to_bilinear(weight, cg_dict)

    out = tensor_product_pallas(x, y, T2, tile_b=2048)
    out = jax.block_until_ready(out)

    ref = reference_forward(x, y, weight, cg_dict)
    ref = jax.block_until_ready(ref)

    assert out.shape == (B, OUT_DIM), out.shape
    np.testing.assert_allclose(np.asarray(out), np.asarray(ref), rtol=2e-4, atol=2e-4)
    print("KERNEL_OK")
</pallas_src>

<mosaic_0001>
module attributes {stable_mosaic.version = 11 : i64} {
  func.func @kernel(%arg0: i32, %arg1: memref<8x16xf32, #tpu.memory_space<vmem>>, %arg2: memref<8x16xf32, #tpu.memory_space<vmem>>, %arg3: memref<256x32xf32, #tpu.memory_space<vmem>>, %arg4: memref<8x32xf32, #tpu.memory_space<vmem>>) attributes {dimension_semantics = [#tpu.dimension_semantics<parallel>], iteration_bounds = array<i64: 2>, scalar_prefetch = 0 : i64, scratch_operands = 0 : i64, tpu.core_type = #tpu.core_type<tc>, window_params = [{transform_indices = @transform_0, window_bounds = array<i64: 8, 16>}, {transform_indices = @transform_1, window_bounds = array<i64: 8, 16>}, {pipeline_mode = #tpu.pipeline_mode<synchronous>, transform_indices = @transform_2, window_bounds = array<i64: 256, 32>}, {transform_indices = @transform_3, window_bounds = array<i64: 8, 32>}]} {
    %c0 = arith.constant 0 : index
    %c0_0 = arith.constant 0 : index
    %0 = vector.load %arg1[%c0, %c0_0] : memref<8x16xf32, #tpu.memory_space<vmem>>, vector<8x16xf32>
    %c0_1 = arith.constant 0 : index
    %c0_2 = arith.constant 0 : index
    %1 = vector.load %arg2[%c0_1, %c0_2] : memref<8x16xf32, #tpu.memory_space<vmem>>, vector<8x16xf32>
    %2 = vector.shape_cast %0 : vector<8x16xf32> to vector<8x16x1xf32>
    %3 = vector.shape_cast %2 : vector<8x16x1xf32> to vector<8x16x1xf32>
    %4 = vector.broadcast %3 : vector<8x16x1xf32> to vector<8x16x16xf32>
    %5 = vector.shape_cast %1 : vector<8x16xf32> to vector<8x1x16xf32>
    %6 = vector.shape_cast %5 : vector<8x1x16xf32> to vector<8x1x16xf32>
    %7 = vector.broadcast %6 : vector<8x1x16xf32> to vector<8x16x16xf32>
    %8 = arith.mulf %4, %7 : vector<8x16x16xf32>
    %9 = vector.shape_cast %8 : vector<8x16x16xf32> to vector<8x256xf32>
    %c0_3 = arith.constant 0 : index
    %c0_4 = arith.constant 0 : index
    %10 = vector.load %arg3[%c0_3, %c0_4] : memref<256x32xf32, #tpu.memory_space<vmem>>, vector<256x32xf32>
    %cst = arith.constant dense<0.000000e+00> : vector<8x32xf32>
    %11 = tpu.matmul %9, %10, %cst {dimension_numbers = #tpu.dot_dimension_numbers<[1], [0], [0], [1], [0, 0, 1, 1], [], []>} : vector<8x256xf32>, vector<256x32xf32>, vector<8x32xf32> -> vector<8x32xf32>
    %c0_5 = arith.constant 0 : index
    %c0_6 = arith.constant 0 : index
    %12 = vector.load %arg4[%c0_5, %c0_6] : memref<8x32xf32, #tpu.memory_space<vmem>>, vector<8x32xf32>
    tpu.vector_store %arg4[%c0_5, %c0_6], %11 {strides = array<i32>} : memref<8x32xf32, #tpu.memory_space<vmem>>, vector<8x32xf32>,
    return
  }
  func.func @transform_0(%arg0: i32) -> (i32, i32) {
    %c0_i32 = arith.constant 0 : i32
    %c0_i32_0 = arith.constant 0 : i32
    return %arg0, %c0_i32 : i32, i32
  }
  func.func @transform_1(%arg0: i32) -> (i32, i32) {
    %c0_i32 = arith.constant 0 : i32
    %c0_i32_0 = arith.constant 0 : i32
    return %arg0, %c0_i32 : i32, i32
  }
  func.func @transform_2(%arg0: i32) -> (i32, i32) {
    %c0_i32 = arith.constant 0 : i32
    %c0_i32_0 = arith.constant 0 : i32
    %c0_i32_1 = arith.constant 0 : i32
    return %c0_i32, %c0_i32_0 : i32, i32
  }
  func.func @transform_3(%arg0: i32) -> (i32, i32) {
    %c0_i32 = arith.constant 0 : i32
    %c0_i32_0 = arith.constant 0 : i32
    return %arg0, %c0_i32 : i32, i32
  }
}

</mosaic_0001>

<llo_original>
// kernel: tpu_custom_call.1
$region0: #{tpu_custom_call.1}
  #allocation0 [shape = 'u32[]', space=smem, size = 0x4, offset = 0x4, fixed_abs, tag = 'smem constant byte address 0x4 - core index']
  #allocation1 [shape = 'u32[144,128]{1,0:T(1,128)}', space=vmem, size = 0x12000, scoped, tag = 'internal scratch']
  %s0 = inlined_call_operand.vmem [shape: f32[16,16], index: 0, kind: input, shape index: {}]
  %s1 = inlined_call_operand.vmem [shape: f32[16,16], index: 1, kind: input, shape index: {}]
  %s2 = inlined_call_operand.vmem [shape: f32[256,32], index: 2, kind: input, shape index: {}]
  %s3 = inlined_call_operand.hbm [shape: f32[16,32], index: 3, kind: output, shape index: {}]
  %s4 = sld [smem:[#allocation0]]
  $region45: #{tpu_custom_call.1} parent=0
    _
  %s6 = ssub.s32 1, %s4
  %s7 = scalar_select 0, %s6, %s4
  $region1: #{tpu_custom_call.1} parent=0
    #allocation2 [shape = 'u8[8192]{0}', space=vmem, size = 0x2000, scoped, tag = 'output window, operand 0']
    #allocation3 [shape = 's32[2]{0}', space=sflag, size = 0x8, scoped, tag = 'scoped memory for tpu_custom_call.1']
    %8 = vsyncpa [#allocation3], 0
    %s9 = scalar_lea.sflag [#allocation3], 1
    %10 = vsyncpa %s9, 0
    loop: start=0, step=1, limit=4
    $region2: #{tpu_custom_call.1} parent=1 // loop_pre_header
      _
    $region3: #{tpu_custom_call.1} parent=1 // loop_header
      %s12 = sphi 0, %s16
      %p13 = scmp.ge.s32.totalorder %s12, 4
      %s22 = sphi 0, %s24
      %s25 = sphi 0, %s22
      %s26 = sphi 0, %s25
      %s42 = sphi 0, %s26
      %s48 = sphi 0, %s50
      %s51 = sphi 0, %s48
      %s52 = sphi 0, %s51
      %s68 = sphi 0, %s52
      %s72 = sphi 0, %s72
      %s74 = sphi 0, %s72
      %s75 = sphi 0, %s74
      %s89 = sphi 0, %s75
      %s95 = sphi 0, %s97
      %s98 = sphi 0, %s95
      %s99 = sphi 0, %s98
      %s115 = sphi 0, %s99
    $region4: #{tpu_custom_call.1} parent=1 // loop_header_branch
      %15 = sbr.rel (%p13) target = $region8
    $region5: #{tpu_custom_call.1} parent=1 // loop_body
      %s17 = ssub.s32 %s12, 1
      %s18 = ssub.s32 %s12, 2
      %s19 = sadd.s32 %s12, 1
      %s20 = ssub.s32 %s12, %s19
      %p21 = scmp.eq.s32.totalorder %s20, 0
      %s23 = sadd.s32 %s22, 1
      %s24 = scalar_select %p21, %s22, %s23
      %p27 = pneg %p21
      %p28 = scmp.eq.s32.totalorder %s12, 1
      %p29 = por %p27, %p28
      %p30 = scmp.ne.s32.totalorder %s22, %s25
      %p31 = scmp.eq.s32.totalorder %s12, 0
      %p32 = por %p30, %p31
      %p33 = scmp.ne.s32.totalorder %s22, %s25
      %p34 = scmp.eq.s32.totalorder %s17, 1
      %p35 = por %p33, %p34
      %p36 = scmp.ne.s32.totalorder %s25, %s26
      %p37 = scmp.eq.s32.totalorder %s17, 0
      %p38 = por %p36, %p37
      %p39 = scmp.ne.s32.totalorder %s25, %s26
      %p40 = scmp.eq.s32.totalorder %s18, 1
      %p41 = por %p39, %p40
      %p43 = scmp.ne.s32.totalorder %s26, %s42
      %p44 = scmp.eq.s32.totalorder %s18, 0
      %p45 = por %p43, %p44
      %s46 = ssub.s32 %s12, %s19
      %p47 = scmp.eq.s32.totalorder %s46, 0
      %s49 = sadd.s32 %s48, 1
      %s50 = scalar_select %p47, %s48, %s49
      %p53 = pneg %p47
      %p54 = scmp.eq.s32.totalorder %s12, 1
      %p55 = por %p53, %p54
      %p56 = scmp.ne.s32.totalorder %s48, %s51
      %p57 = scmp.eq.s32.totalorder %s12, 0
      %p58 = por %p56, %p57
      %p59 = scmp.ne.s32.totalorder %s48, %s51
      %p60 = scmp.eq.s32.totalorder %s17, 1
      %p61 = por %p59, %p60
      %p62 = scmp.ne.s32.totalorder %s51, %s52
      %p63 = scmp.eq.s32.totalorder %s17, 0
      %p64 = por %p62, %p63
      %p65 = scmp.ne.s32.totalorder %s51, %s52
      %p66 = scmp.eq.s32.totalorder %s18, 1
      %p67 = por %p65, %p66
      %p69 = scmp.ne.s32.totalorder %s52, %s68
      %p70 = scmp.eq.s32.totalorder %s18, 0
      %p71 = por %p69, %p70
      %s73 = sadd.s32 %s72, 1
      %p76 = scmp.eq.s32.totalorder %s12, 1
      %p77 = scmp.ne.s32.totalorder %s72, %s74
      %p78 = scmp.eq.s32.totalorder %s12, 0
      %p79 = por %p77, %p78
      %p80 = scmp.ne.s32.totalorder %s72, %s74
      %p81 = scmp.eq.s32.totalorder %s17, 1
      %p82 = por %p80, %p81
      %p83 = scmp.ne.s32.totalorder %s74, %s75
      %p84 = scmp.eq.s32.totalorder %s17, 0
      %p85 = por %p83, %p84
      %p86 = scmp.ne.s32.totalorder %s74, %s75
      %p87 = scmp.eq.s32.totalorder %s18, 1
      %p88 = por %p86, %p87
      %p90 = scmp.ne.s32.totalorder %s75, %s89
      %p91 = scmp.eq.s32.totalorder %s18, 0
      %p92 = por %p90, %p91
      %s93 = ssub.s32 %s12, %s19
      %p94 = scmp.eq.s32.totalorder %s93, 0
      %s96 = sadd.s32 %s95, 1
      %s97 = scalar_select %p94, %s95, %s96
      %p100 = pneg %p94
      %p101 = scmp.eq.s32.totalorder %s12, 1
      %p102 = por %p100, %p101
      %p103 = scmp.ne.s32.totalorder %s95, %s98
      %p104 = scmp.eq.s32.totalorder %s12, 0
      %p105 = por %p103, %p104
      %p106 = scmp.ne.s32.totalorder %s95, %s98
      %p107 = scmp.eq.s32.totalorder %s17, 1
      %p108 = por %p106, %p107
      %p109 = scmp.ne.s32.totalorder %s98, %s99
      %p110 = scmp.eq.s32.totalorder %s17, 0
      %p111 = por %p109, %p110
      %p112 = scmp.ne.s32.totalorder %s98, %s99
      %p113 = scmp.eq.s32.totalorder %s18, 1
      %p114 = por %p112, %p113
      %p116 = scmp.ne.s32.totalorder %s99, %s115
      %p117 = scmp.eq.s32.totalorder %s18, 0
      %p118 = por %p116, %p117
      %p119 = scmp.le.s32.totalorder 1, %s12
      %p120 = scmp.lt.s32.totalorder %s12, 3
      %p121 = pnand %p119, %p120
      %p122 = pneg %p121
      // Predicated region
      $region9: #{tpu_custom_call.1} parent=5 // pred_check
        _
      $region10: #{tpu_custom_call.1} parent=5 // pred_check_branch
        %124 = sbr.rel (%p121) target = $region12
      $region11: #{tpu_custom_call.1} parent=5 // pred_region
        %s125 = ssub.s32 %s12, 1
        // Predicated region
        $region13: #{tpu_custom_call.1} parent=11 // pred_check
          %p126 = pneg %p85
        $region14: #{tpu_custom_call.1} parent=11 // pred_check_branch
          %128 = sbr.rel (%p126) target = $region16
        $region15: #{tpu_custom_call.1} parent=11 // pred_region
          _
        $region16: #{tpu_custom_call.1} parent=11 // pred_fallthru
          _
      $region12: #{tpu_custom_call.1} parent=5 // pred_fallthru
        _
      %p129 = scmp.lt.s32.totalorder %s12, 2
      // Predicated region
      $region17: #{tpu_custom_call.1} parent=5 // pred_check
        %p130 = pneg %p129
      $region18: #{tpu_custom_call.1} parent=5 // pred_check_branch
        %132 = sbr.rel (%p130) target = $region20
      $region19: #{tpu_custom_call.1} parent=5 // pred_region
        // Predicated region
        $region21: #{tpu_custom_call.1} parent=19 // pred_check
          %p133 = pneg %p32
        $region22: #{tpu_custom_call.1} parent=19 // pred_check_branch
          %135 = sbr.rel (%p133) target = $region24
        $region23: #{tpu_custom_call.1} parent=19 // pred_region
          %p136 = scmp.lt.s32.totalorder %s12, 1
          %s137 = scalar_select %p136, %s12, 1
          %s138 = smul.addr %s137, 8
          %s139 = scalar_lea.vmem %s0, %s138
        $region24: #{tpu_custom_call.1} parent=19 // pred_fallthru
          _
        // Predicated region
        $region25: #{tpu_custom_call.1} parent=19 // pred_check
          %p140 = pneg %p58
        $region26: #{tpu_custom_call.1} parent=19 // pred_check_branch
          %142 = sbr.rel (%p140) target = $region28
        $region27: #{tpu_custom_call.1} parent=19 // pred_region
          %p143 = scmp.lt.s32.totalorder %s12, 1
          %s144 = scalar_select %p143, %s12, 1
          %s145 = smul.addr %s144, 8
          %s146 = scalar_lea.vmem %s1, %s145
        $region28: #{tpu_custom_call.1} parent=19 // pred_fallthru
          _
      $region20: #{tpu_custom_call.1} parent=5 // pred_fallthru
        _
      %p147 = scmp.le.s32.totalorder 1, %s12
      %p148 = scmp.lt.s32.totalorder %s12, 3
      %p149 = pnand %p147, %p148
      %p150 = pneg %p149
      // Predicated region
      $region29: #{tpu_custom_call.1} parent=5 // pred_check
        _
      $region30: #{tpu_custom_call.1} parent=5 // pred_check_branch
        %152 = sbr.rel (%p149) target = $region32
      $region31: #{tpu_custom_call.1} parent=5 // pred_region
        %s153 = ssub.s32 %s12, 1
        %p154 = scmp.lt.s32.totalorder %s17, 1
        %s155 = scalar_select %p154, %s17, 1
        %s156 = smul.addr %s155, 8
        %s157 = scalar_lea.vmem %s0, %s156
        %p158 = pneg %p38
        %p159 = pneg %p35
        %p160 = scmp.lt.s32.totalorder %s17, 1
        %s161 = scalar_select %p160, %s17, 1
        %s162 = smul.addr %s161, 8
        %s163 = scalar_lea.vmem %s1, %s162
        %p164 = pneg %p64
        %p165 = pneg %p61
        %p166 = pneg %p85
        %p167 = pneg %p82
        %p168 = pneg %p111
        %p169 = pneg %p108
        %s170 = sand.u32 %s98, 1
        %s171 = scalar_lea.sflag [#allocation3], %s170
        %s172 = sand.u32 %s98, 1
        %s173 = smul.addr %s172, 8
        %s174 = scalar_lea.vmem [#allocation2], %s173
        %p175 = scmp.lt.s32.totalorder %s17, 1
        %s176 = scalar_select %p175, %s17, 1
        %s177 = smul.addr %s176, 8
        %s178 = scalar_lea.vmem %s0, %s177
        %p179 = scmp.lt.s32.totalorder %s17, 1
        %s180 = scalar_select %p179, %s17, 1
        %s181 = smul.addr %s180, 8
        %s182 = scalar_lea.vmem %s1, %s181
        %v183 = vld [vmem:[%s178] sm:$0xff]
        %v184 = vld [vmem:[%s182] sm:$0xff]
        %v185 = vlaneseq
        %v186 = vshrl.u32 %v185, 7
        %v187 = vsub.s32 0, %v186
        %v188 = vrot.slane %v183, %v187
        %190 = vbcast.lane.b32.xlu0 %v188, 256
        %v191 = vpop.permute.xlu0 %190
        %s193 = sor.u32 256, 8
        %194 = vbcast.lane.b32.xlu0 %v188, %s193
        %v195 = vpop.permute.xlu0 %194
        %v196 = vlaneseq
        %v197 = vshrl.u32 %v196, 7
        %v198 = vsub.s32 1, %v197
        %v199 = vrot.slane %v183, %v198
        %201 = vbcast.lane.b32.xlu0 %v199, 256
        %v202 = vpop.permute.xlu0 %201
        %s204 = sor.u32 256, 8
        %205 = vbcast.lane.b32.xlu0 %v199, %s204
        %v206 = vpop.permute.xlu0 %205
        %v207 = vlaneseq
        %v208 = vshrl.u32 %v207, 7
        %v209 = vsub.s32 2, %v208
        %v210 = vrot.slane %v183, %v209
        %212 = vbcast.lane.b32.xlu0 %v210, 256
        %v213 = vpop.permute.xlu0 %212
        %s215 = sor.u32 256, 8
        %216 = vbcast.lane.b32.xlu0 %v210, %s215
        %v217 = vpop.permute.xlu0 %216
        %v218 = vlaneseq
        %v219 = vshrl.u32 %v218, 7
        %v220 = vsub.s32 3, %v219
        %v221 = vrot.slane %v183, %v220
        %223 = vbcast.lane.b32.xlu0 %v221, 256
        %v224 = vpop.permute.xlu0 %223
        %s226 = sor.u32 256, 8
        %227 = vbcast.lane.b32.xlu0 %v221, %s226
        %v228 = vpop.permute.xlu0 %227
        %v229 = vlaneseq
        %v230 = vshrl.u32 %v229, 7
        %v231 = vsub.s32 4, %v230
        %v232 = vrot.slane %v183, %v231
        %234 = vbcast.lane.b32.xlu0 %v232, 256
        %v235 = vpop.permute.xlu0 %234
        %s237 = sor.u32 256, 8
        %238 = vbcast.lane.b32.xlu0 %v232, %s237
        %v239 = vpop.permute.xlu0 %238
        %v240 = vlaneseq
        %v241 = vshrl.u32 %v240, 7
        %v242 = vsub.s32 5, %v241
        %v243 = vrot.slane %v183, %v242
        %245 = vbcast.lane.b32.xlu0 %v243, 256
        %v246 = vpop.permute.xlu0 %245
        %s248 = sor.u32 256, 8
        %249 = vbcast.lane.b32.xlu0 %v243, %s248
        %v250 = vpop.permute.xlu0 %249
        %v251 = vlaneseq
        %v252 = vshrl.u32 %v251, 7
        %v253 = vsub.s32 6, %v252
        %v254 = vrot.slane %v183, %v253
        %256 = vbcast.lane.b32.xlu0 %v254, 256
        %v257 = vpop.permute.xlu0 %256
        %s259 = sor.u32 256, 8
        %260 = vbcast.lane.b32.xlu0 %v254, %s259
        %v261 = vpop.permute.xlu0 %260
        %v262 = vlaneseq
        %v263 = vshrl.u32 %v262, 7
        %v264 = vsub.s32 7, %v263
        %v265 = vrot.slane %v183, %v264
        %267 = vbcast.lane.b32.xlu0 %v265, 256
        %v268 = vpop.permute.xlu0 %267
        %s270 = sor.u32 256, 8
        %271 = vbcast.lane.b32.xlu0 %v265, %s270
        %v272 = vpop.permute.xlu0 %271
        %v274 = vcombine.high %v184, %v184
        %v276 = vunpack.c.l.s4 1966171168
        %v277 = vunpack.c.0.s8 %v276
        %v278 = vlaneseq
        %v279 = vshrl.u32 %v278, 7
        %v280 = vsub.s32 %v277, %v279
        %v281 = vrot.slane %v184, %v280
        %v283 = vunpack.c.l.s4 1966171168
        %v284 = vunpack.c.0.s8 %v283
        %v285 = vlaneseq
        %v286 = vshrl.u32 %v285, 7
        %v287 = vsub.s32 %v284, %v286
        %v288 = vrot.slane %v274, %v287
        %v289 = vcombine.high %v281, %v281
        %v290 = vcombine.high %v288, %v288
        %v292 = vunpack.c.l.s4 1966171168
        %v293 = vunpack.c.0.s8 %v292
        %v294 = vlaneseq
        %v295 = vshrl.u32 %v294, 7
        %v296 = vsub.s32 %v293, %v295
        %v297 = vrot.slane %v281, %v296
        %v299 = vunpack.c.l.s4 1966171168
        %v300 = vunpack.c.0.s8 %v299
        %v301 = vlaneseq
        %v302 = vshrl.u32 %v301, 7
        %v303 = vsub.s32 %v300, %v302
        %v304 = vrot.slane %v288, %v303
        %v306 = vunpack.c.l.s4 1966171168
        %v307 = vunpack.c.0.s8 %v306
        %v308 = vlaneseq
        %v309 = vshrl.u32 %v308, 7
        %v310 = vsub.s32 %v307, %v309
        %v311 = vrot.slane %v289, %v310
        %v313 = vunpack.c.l.s4 1966171168
        %v314 = vunpack.c.0.s8 %v313
        %v315 = vlaneseq
        %v316 = vshrl.u32 %v315, 7
        %v317 = vsub.s32 %v314, %v316
        %v318 = vrot.slane %v290, %v317
        %v319 = vcombine.high %v297, %v297
        %v320 = vcombine.high %v304, %v304
        %v321 = vcombine.high %v311, %v311
        %v322 = vcombine.high %v318, %v318
        %v323 = vlaneseq
        %v324 = vshrl.u32 %v323, 7
        %v325 = vsub.s32 0, %v324
        %v326 = vrot.slane %v297, %v325
        %v327 = vlaneseq
        %v328 = vshrl.u32 %v327, 7
        %v329 = vsub.s32 0, %v328
        %v330 = vrot.slane %v311, %v329
        %v331 = vlaneseq
        %v332 = vshrl.u32 %v331, 7
        %v333 = vsub.s32 0, %v332
        %v334 = vrot.slane %v319, %v333
        %v335 = vlaneseq
        %v336 = vshrl.u32 %v335, 7
        %v337 = vsub.s32 0, %v336
        %v338 = vrot.slane %v321, %v337
        %v339 = vlaneseq
        %v340 = vshrl.u32 %v339, 7
        %v341 = vsub.s32 0, %v340
        %v342 = vrot.slane %v304, %v341
        %v343 = vlaneseq
        %v344 = vshrl.u32 %v343, 7
        %v345 = vsub.s32 0, %v344
        %v346 = vrot.slane %v318, %v345
        %v347 = vlaneseq
        %v348 = vshrl.u32 %v347, 7
        %v349 = vsub.s32 0, %v348
        %v350 = vrot.slane %v320, %v349
        %v351 = vlaneseq
        %v352 = vshrl.u32 %v351, 7
        %v353 = vsub.s32 0, %v352
        %v354 = vrot.slane %v322, %v353
        %v363 = vmul.f32 %v191, %v326
        %v364 = vmul.f32 %v195, %v326
        %v365 = vmul.f32 %v202, %v330
        %v366 = vmul.f32 %v206, %v330
        %v367 = vmul.f32 %v213, %v334
        %v368 = vmul.f32 %v217, %v334
        %v369 = vmul.f32 %v224, %v338
        %v370 = vmul.f32 %v228, %v338
        %v371 = vmul.f32 %v235, %v342
        %v372 = vmul.f32 %v239, %v342
        %v373 = vmul.f32 %v246, %v346
        %v374 = vmul.f32 %v250, %v346
        %v375 = vmul.f32 %v257, %v350
        %v376 = vmul.f32 %v261, %v350
        %v377 = vmul.f32 %v268, %v354
        %v378 = vmul.f32 %v272, %v354
        %v379 = vcombine.low %v363, %v367
        %v380 = vcombine.high %v363, %v367
        %v382 = vunpack.c.l.s4 1983009808
        %v383 = vunpack.c.0.s8 %v382
        %v384 = vlaneseq
        %v385 = vshrl.u32 %v384, 7
        %v386 = vsub.s32 %v383, %v385
        %v387 = vrot.slane %v379, %v386
        %v389 = vunpack.c.l.s4 1983009808
        %v390 = vunpack.c.0.s8 %v389
        %v391 = vlaneseq
        %v392 = vshrl.u32 %v391, 7
        %v393 = vsub.s32 %v390, %v392
        %v394 = vrot.slane %v380, %v393
        %v395 = vcombine.low %v365, %v369
        %v396 = vcombine.high %v365, %v369
        %v398 = vunpack.c.l.s4 1983009808
        %v399 = vunpack.c.0.s8 %v398
        %v400 = vlaneseq
        %v401 = vshrl.u32 %v400, 7
        %v402 = vsub.s32 %v399, %v401
        %v403 = vrot.slane %v395, %v402
        %v405 = vunpack.c.l.s4 1983009808
        %v406 = vunpack.c.0.s8 %v405
        %v407 = vlaneseq
        %v408 = vshrl.u32 %v407, 7
        %v409 = vsub.s32 %v406, %v408
        %v410 = vrot.slane %v396, %v409
        %v411 = vcombine.low %v371, %v375
        %v412 = vcombine.high %v371, %v375
        %v414 = vunpack.c.l.s4 1983009808
        %v415 = vunpack.c.0.s8 %v414
        %v416 = vlaneseq
        %v417 = vshrl.u32 %v416, 7
        %v418 = vsub.s32 %v415, %v417
        %v419 = vrot.slane %v411, %v418
        %v421 = vunpack.c.l.s4 1983009808
        %v422 = vunpack.c.0.s8 %v421
        %v423 = vlaneseq
        %v424 = vshrl.u32 %v423, 7
        %v425 = vsub.s32 %v422, %v424
        %v426 = vrot.slane %v412, %v425
        %v427 = vcombine.low %v373, %v377
        %v428 = vcombine.high %v373, %v377
        %v430 = vunpack.c.l.s4 1983009808
        %v431 = vunpack.c.0.s8 %v430
        %v432 = vlaneseq
        %v433 = vshrl.u32 %v432, 7
        %v434 = vsub.s32 %v431, %v433
        %v435 = vrot.slane %v427, %v434
        %v437 = vunpack.c.l.s4 1983009808
        %v438 = vunpack.c.0.s8 %v437
        %v439 = vlaneseq
        %v440 = vshrl.u32 %v439, 7
        %v441 = vsub.s32 %v438, %v440
        %v442 = vrot.slane %v428, %v441
        %v443 = vcombine.low %v387, %v403
        %v444 = vcombine.high %v387, %v403
        %v446 = vunpack.c.l.s4 1934713408
        %v447 = vunpack.c.0.s8 %v446
        %v448 = vlaneseq
        %v449 = vshrl.u32 %v448, 7
        %v450 = vsub.s32 %v447, %v449
        %v451 = vrot.slane %v443, %v450
        %v453 = vunpack.c.l.s4 1934713408
        %v454 = vunpack.c.0.s8 %v453
        %v455 = vlaneseq
        %v456 = vshrl.u32 %v455, 7
        %v457 = vsub.s32 %v454, %v456
        %v458 = vrot.slane %v444, %v457
        %v459 = vcombine.low %v394, %v410
        %v460 = vcombine.high %v394, %v410
        %v462 = vunpack.c.l.s4 1934713408
        %v463 = vunpack.c.0.s8 %v462
        %v464 = vlaneseq
        %v465 = vshrl.u32 %v464, 7
        %v466 = vsub.s32 %v463, %v465
        %v467 = vrot.slane %v459, %v466
        %v469 = vunpack.c.l.s4 1934713408
        %v470 = vunpack.c.0.s8 %v469
        %v471 = vlaneseq
        %v472 = vshrl.u32 %v471, 7
        %v473 = vsub.s32 %v470, %v472
        %v474 = vrot.slane %v460, %v473
        %v475 = vcombine.low %v419, %v435
        %v476 = vcombine.high %v419, %v435
        %v478 = vunpack.c.l.s4 1934713408
        %v479 = vunpack.c.0.s8 %v478
        %v480 = vlaneseq
        %v481 = vshrl.u32 %v480, 7
        %v482 = vsub.s32 %v479, %v481
        %v483 = vrot.slane %v475, %v482
        %v485 = vunpack.c.l.s4 1934713408
        %v486 = vunpack.c.0.s8 %v485
        %v487 = vlaneseq
        %v488 = vshrl.u32 %v487, 7
        %v489 = vsub.s32 %v486, %v488
        %v490 = vrot.slane %v476, %v489
        %v491 = vcombine.low %v426, %v442
        %v492 = vcombine.high %v426, %v442
        %v494 = vunpack.c.l.s4 1934713408
        %v495 = vunpack.c.0.s8 %v494
        %v496 = vlaneseq
        %v497 = vshrl.u32 %v496, 7
        %v498 = vsub.s32 %v495, %v497
        %v499 = vrot.slane %v491, %v498
        %v501 = vunpack.c.l.s4 1934713408
        %v502 = vunpack.c.0.s8 %v501
        %v503 = vlaneseq
        %v504 = vshrl.u32 %v503, 7
        %v505 = vsub.s32 %v502, %v504
        %v506 = vrot.slane %v492, %v505
        %v507 = vcombine.low %v451, %v483
        %v508 = vcombine.high %v451, %v483
        %v509 = vcombine.low %v458, %v490
        %v510 = vcombine.high %v458, %v490
        %v511 = vcombine.low %v467, %v499
        %v512 = vcombine.high %v467, %v499
        %v513 = vcombine.low %v474, %v506
        %v514 = vcombine.high %v474, %v506
        %v515 = vcombine.low %v364, %v368
        %v516 = vcombine.high %v364, %v368
        %v518 = vunpack.c.l.s4 1983009808
        %v519 = vunpack.c.0.s8 %v518
        %v520 = vlaneseq
        %v521 = vshrl.u32 %v520, 7
        %v522 = vsub.s32 %v519, %v521
        %v523 = vrot.slane %v515, %v522
        %v525 = vunpack.c.l.s4 1983009808
        %v526 = vunpack.c.0.s8 %v525
        %v527 = vlaneseq
        %v528 = vshrl.u32 %v527, 7
        %v529 = vsub.s32 %v526, %v528
        %v530 = vrot.slane %v516, %v529
        %v531 = vcombine.low %v366, %v370
        %v532 = vcombine.high %v366, %v370
        %v534 = vunpack.c.l.s4 1983009808
        %v535 = vunpack.c.0.s8 %v534
        %v536 = vlaneseq
        %v537 = vshrl.u32 %v536, 7
        %v538 = vsub.s32 %v535, %v537
        %v539 = vrot.slane %v531, %v538
        %v541 = vunpack.c.l.s4 1983009808
        %v542 = vunpack.c.0.s8 %v541
        %v543 = vlaneseq
        %v544 = vshrl.u32 %v543, 7
        %v545 = vsub.s32 %v542, %v544
        %v546 = vrot.slane %v532, %v545
        %v547 = vcombine.low %v372, %v376
        %v548 = vcombine.high %v372, %v376
        %v550 = vunpack.c.l.s4 1983009808
        %v551 = vunpack.c.0.s8 %v550
        %v552 = vlaneseq
        %v553 = vshrl.u32 %v552, 7
        %v554 = vsub.s32 %v551, %v553
        %v555 = vrot.slane %v547, %v554
        %v557 = vunpack.c.l.s4 1983009808
        %v558 = vunpack.c.0.s8 %v557
        %v559 = vlaneseq
        %v560 = vshrl.u32 %v559, 7
        %v561 = vsub.s32 %v558, %v560
        %v562 = vrot.slane %v548, %v561
        %v563 = vcombine.low %v374, %v378
        %v564 = vcombine.high %v374, %v378
        %v566 = vunpack.c.l.s4 1983009808
        %v567 = vunpack.c.0.s8 %v566
        %v568 = vlaneseq
        %v569 = vshrl.u32 %v568, 7
        %v570 = vsub.s32 %v567, %v569
        %v571 = vrot.slane %v563, %v570
        %v573 = vunpack.c.l.s4 1983009808
        %v574 = vunpack.c.0.s8 %v573
        %v575 = vlaneseq
        %v576 = vshrl.u32 %v575, 7
        %v577 = vsub.s32 %v574, %v576
        %v578 = vrot.slane %v564, %v577
        %v579 = vcombine.low %v523, %v539
        %v580 = vcombine.high %v523, %v539
        %v582 = vunpack.c.l.s4 1934713408
        %v583 = vunpack.c.0.s8 %v582
        %v584 = vlaneseq
        %v585 = vshrl.u32 %v584, 7
        %v586 = vsub.s32 %v583, %v585
        %v587 = vrot.slane %v579, %v586
        %v589 = vunpack.c.l.s4 1934713408
        %v590 = vunpack.c.0.s8 %v589
        %v591 = vlaneseq
        %v592 = vshrl.u32 %v591, 7
        %v593 = vsub.s32 %v590, %v592
        %v594 = vrot.slane %v580, %v593
        %v595 = vcombine.low %v530, %v546
        %v596 = vcombine.high %v530, %v546
        %v598 = vunpack.c.l.s4 1934713408
        %v599 = vunpack.c.0.s8 %v598
        %v600 = vlaneseq
        %v601 = vshrl.u32 %v600, 7
        %v602 = vsub.s32 %v599, %v601
        %v603 = vrot.slane %v595, %v602
        %v605 = vunpack.c.l.s4 1934713408
        %v606 = vunpack.c.0.s8 %v605
        %v607 = vlaneseq
        %v608 = vshrl.u32 %v607, 7
        %v609 = vsub.s32 %v606, %v608
        %v610 = vrot.slane %v596, %v609
        %v611 = vcombine.low %v555, %v571
        %v612 = vcombine.high %v555, %v571
        %v614 = vunpack.c.l.s4 1934713408
        %v615 = vunpack.c.0.s8 %v614
        %v616 = vlaneseq
        %v617 = vshrl.u32 %v616, 7
        %v618 = vsub.s32 %v615, %v617
        %v619 = vrot.slane %v611, %v618
        %v621 = vunpack.c.l.s4 1934713408
        %v622 = vunpack.c.0.s8 %v621
        %v623 = vlaneseq
        %v624 = vshrl.u32 %v623, 7
        %v625 = vsub.s32 %v622, %v624
        %v626 = vrot.slane %v612, %v625
        %v627 = vcombine.low %v562, %v578
        %v628 = vcombine.high %v562, %v578
        %v630 = vunpack.c.l.s4 1934713408
        %v631 = vunpack.c.0.s8 %v630
        %v632 = vlaneseq
        %v633 = vshrl.u32 %v632, 7
        %v634 = vsub.s32 %v631, %v633
        %v635 = vrot.slane %v627, %v634
        %v637 = vunpack.c.l.s4 1934713408
        %v638 = vunpack.c.0.s8 %v637
        %v639 = vlaneseq
        %v640 = vshrl.u32 %v639, 7
        %v641 = vsub.s32 %v638, %v640
        %v642 = vrot.slane %v628, %v641
        %v643 = vcombine.low %v587, %v619
        %v644 = vcombine.high %v587, %v619
        %v645 = vcombine.low %v594, %v626
        %v646 = vcombine.high %v594, %v626
        %v647 = vcombine.low %v603, %v635
        %v648 = vcombine.high %v603, %v635
        %v649 = vcombine.low %v610, %v642
        %v650 = vcombine.high %v610, %v642
        %652 = vrot.lane.b32.xlu0 %v508, 16
        %v653 = vpop.permute.xlu0 %652
        %656 = vrot.lane.b32.xlu0 %v509, 32
        %v657 = vpop.permute.xlu0 %656
        %660 = vrot.lane.b32.xlu0 %v510, 48
        %v661 = vpop.permute.xlu0 %660
        %664 = vrot.lane.b32.xlu0 %v511, 64
        %v665 = vpop.permute.xlu0 %664
        %668 = vrot.lane.b32.xlu0 %v512, 80
        %v669 = vpop.permute.xlu0 %668
        %672 = vrot.lane.b32.xlu0 %v513, 96
        %v673 = vpop.permute.xlu0 %672
        %676 = vrot.lane.b32.xlu0 %v514, 112
        %v677 = vpop.permute.xlu0 %676
        %680 = vrot.lane.b32.xlu0 %v644, 16
        %v681 = vpop.permute.xlu0 %680
        %684 = vrot.lane.b32.xlu0 %v645, 32
        %v685 = vpop.permute.xlu0 %684
        %688 = vrot.lane.b32.xlu0 %v646, 48
        %v689 = vpop.permute.xlu0 %688
        %692 = vrot.lane.b32.xlu0 %v647, 64
        %v693 = vpop.permute.xlu0 %692
        %696 = vrot.lane.b32.xlu0 %v648, 80
        %v697 = vpop.permute.xlu0 %696
        %700 = vrot.lane.b32.xlu0 %v649, 96
        %v701 = vpop.permute.xlu0 %700
        %704 = vrot.lane.b32.xlu0 %v650, 112
        %v705 = vpop.permute.xlu0 %704
        %vm707 = vcmask 130048
        %v708 = vsel %vm707, %v507, %v653
        %vm709 = vcmask 261120
        %v710 = vsel %vm709, %v708, %v657
        %vm711 = vcmask 392192
        %v712 = vsel %vm711, %v710, %v661
        %vm713 = vcmask 523264
        %v714 = vsel %vm713, %v712, %v665
        %vm715 = vcmask 654336
        %v716 = vsel %vm715, %v714, %v669
        %vm717 = vcmask 785408
        %v718 = vsel %vm717, %v716, %v673
        %vm719 = vcmask 916480
        %v720 = vsel %vm719, %v718, %v677
        %v721 = vsel %vm707, %v643, %v681
        %v722 = vsel %vm709, %v721, %v685
        %v723 = vsel %vm711, %v722, %v689
        %v724 = vsel %vm713, %v723, %v693
        %v725 = vsel %vm715, %v724, %v697
        %v726 = vsel %vm717, %v725, %v701
        %v727 = vsel %vm719, %v726, %v705
        %v728 = vld [vmem:[%s2] sm:$0xff]
        %v729 = vld [vmem:[%s2 + $0x8] sm:$0xff]
        %v730 = vld [vmem:[%s2 + $0x10] sm:$0xff]
        %v731 = vld [vmem:[%s2 + $0x18] sm:$0xff]
        %v732 = vld [vmem:[%s2 + $0x20] sm:$0xff]
        %v733 = vld [vmem:[%s2 + $0x28] sm:$0xff]
        %v734 = vld [vmem:[%s2 + $0x30] sm:$0xff]
        %v735 = vld [vmem:[%s2 + $0x38] sm:$0xff]
        %v736 = vld [vmem:[%s2 + $0x40] sm:$0xff]
        %v737 = vld [vmem:[%s2 + $0x48] sm:$0xff]
        %v738 = vld [vmem:[%s2 + $0x50] sm:$0xff]
        %v739 = vld [vmem:[%s2 + $0x58] sm:$0xff]
        %v740 = vld [vmem:[%s2 + $0x60] sm:$0xff]
        %v741 = vld [vmem:[%s2 + $0x68] sm:$0xff]
        %v742 = vld [vmem:[%s2 + $0x70] sm:$0xff]
        %v743 = vld [vmem:[%s2 + $0x78] sm:$0xff]
        %v744 = vld [vmem:[%s2 + $0x80] sm:$0xff]
        %v745 = vld [vmem:[%s2 + $0x88] sm:$0xff]
        %v746 = vld [vmem:[%s2 + $0x90] sm:$0xff]
        %v747 = vld [vmem:[%s2 + $0x98] sm:$0xff]
        %v748 = vld [vmem:[%s2 + $0xa0] sm:$0xff]
        %v749 = vld [vmem:[%s2 + $0xa8] sm:$0xff]
        %v750 = vld [vmem:[%s2 + $0xb0] sm:$0xff]
        %v751 = vld [vmem:[%s2 + $0xb8] sm:$0xff]
        %v752 = vld [vmem:[%s2 + $0xc0] sm:$0xff]
        %v753 = vld [vmem:[%s2 + $0xc8] sm:$0xff]
        %v754 = vld [vmem:[%s2 + $0xd0] sm:$0xff]
        %v755 = vld [vmem:[%s2 + $0xd8] sm:$0xff]
        %v756 = vld [vmem:[%s2 + $0xe0] sm:$0xff]
        %v757 = vld [vmem:[%s2 + $0xe8] sm:$0xff]
        %v758 = vld [vmem:[%s2 + $0xf0] sm:$0xff]
        %v759 = vld [vmem:[%s2 + $0xf8] sm:$0xff]
        %760 = vmatprep.subr.mxu0 0.0
        %761 = vmatpush1.msra.mxu0 %v743
        %762 = vmatprep.subr.mxu0 0.0
        %763 = vmatpush1.msra.mxu0 %v742
        %764 = vmatprep.subr.mxu0 0.0
        %765 = vmatpush1.msra.mxu0 %v741
        %766 = vmatprep.subr.mxu0 0.0
        %767 = vmatpush1.msra.mxu0 %v740
        %768 = vmatprep.subr.mxu0 0.0
        %769 = vmatpush1.msra.mxu0 %v739
        %770 = vmatprep.subr.mxu0 0.0
        %771 = vmatpush1.msra.mxu0 %v738
        %772 = vmatprep.subr.mxu0 0.0
        %773 = vmatpush1.msra.mxu0 %v737
        %774 = vmatprep.subr.mxu0 0.0
        %775 = vmatpush1.msra.mxu0 %v736
        %776 = vmatprep.subr.mxu0 0.0
        %777 = vmatpush1.msra.mxu0 %v735
        %778 = vmatprep.subr.mxu0 0.0
        %779 = vmatpush1.msra.mxu0 %v734
        %780 = vmatprep.subr.mxu0 0.0
        %781 = vmatpush1.msra.mxu0 %v733
        %782 = vmatprep.subr.mxu0 0.0
        %783 = vmatpush1.msra.mxu0 %v732
        %784 = vmatprep.subr.mxu0 0.0
        %785 = vmatpush1.msra.mxu0 %v731
        %786 = vmatprep.subr.mxu0 0.0
        %787 = vmatpush1.msra.mxu0 %v730
        %788 = vmatprep.subr.mxu0 0.0
        %789 = vmatpush1.msra.mxu0 %v729
        %790 = vmatprep.subr.mxu0 0.0
        %791 = vmatpush1.msra.mxu0 %v728
        %792 = vmatprep.subr.mxu0 0.0
        %793 = vmatpush2.msra.mxu0 %v759
        %794 = vmatprep.subr.mxu0 0.0
        %795 = vmatpush2.msra.mxu0 %v758
        %796 = vmatprep.subr.mxu0 0.0
        %797 = vmatpush2.msra.mxu0 %v757
        %798 = vmatprep.subr.mxu0 0.0
        %799 = vmatpush2.msra.mxu0 %v756
        %800 = vmatprep.subr.mxu0 0.0
        %801 = vmatpush2.msra.mxu0 %v755
        %802 = vmatprep.subr.mxu0 0.0
        %803 = vmatpush2.msra.mxu0 %v754
        %804 = vmatprep.subr.mxu0 0.0
        %805 = vmatpush2.msra.mxu0 %v753
        %806 = vmatprep.subr.mxu0 0.0
        %807 = vmatpush2.msra.mxu0 %v752
        %808 = vmatprep.subr.mxu0 0.0
        %809 = vmatpush2.msra.mxu0 %v751
        %810 = vmatprep.subr.mxu0 0.0
        %811 = vmatpush2.msra.mxu0 %v750
        %812 = vmatprep.subr.mxu0 0.0
        %813 = vmatpush2.msra.mxu0 %v749
        %814 = vmatprep.subr.mxu0 0.0
        %815 = vmatpush2.msra.mxu0 %v748
        %816 = vmatprep.subr.mxu0 0.0
        %817 = vmatpush2.msra.mxu0 %v747
        %818 = vmatprep.subr.mxu0 0.0
        %819 = vmatpush2.msra.mxu0 %v746
        %820 = vmatprep.subr.mxu0 0.0
        %821 = vmatpush2.msra.mxu0 %v745
        %822 = vmatprep.subr.mxu0 0.0
        %823 = vmatpush2.msra.mxu0 %v744
        %824 = vmatprep.mubr.f32.mxu0 %v727
        %825 = vmatmul.mubr.f32.gmra.mxu0 %v720
        %v826 = vpop.f32.mrf.mxu0
        %v827 = vadd.f32 0.0, %v826
        %v828 = vpop.f32.mrf.mxu0
        %829 = vdwg.mxu0
        %830 = vst.msk [vmem:[%s174] sm:$0xff] %vm709, %v827
        %s831 = sand.u32 %s98, 1
        %s832 = scalar_lea.sflag [#allocation3], %s831
        %s833 = sand.u32 %s98, 1
        %s834 = smul.addr %s833, 8
        %s835 = scalar_lea.vmem [#allocation2], %s834
        // Predicated region
        $region33: #{tpu_custom_call.1} parent=31 // pred_check
          %p836 = pneg %p108
        $region34: #{tpu_custom_call.1} parent=31 // pred_check_branch
          %838 = sbr.rel (%p836) target = $region36
        $region35: #{tpu_custom_call.1} parent=31 // pred_region
          %s840 = ssub.s32 128, 128
          %841 = vsyncadd %s832, %s840
          %s842 = smul.addr %s17, 128
          %s843 = scalar_lea.hbm %s3, %s842
          %s845 = sshll.u32 %s835, 4
          %s846 = int_to_ptr.vmem [resolvable:$true] %s845
          %848 = dma.vmem_to_hbm [thread:$0]  %s846, 128, %s843, %s832
        $region36: #{tpu_custom_call.1} parent=31 // pred_fallthru
          _
      $region32: #{tpu_custom_call.1} parent=5 // pred_fallthru
        _
      %p849 = scmp.le.s32.totalorder 2, %s12
      // Predicated region
      $region37: #{tpu_custom_call.1} parent=5 // pred_check
        %p850 = pneg %p849
      $region38: #{tpu_custom_call.1} parent=5 // pred_check_branch
        %852 = sbr.rel (%p850) target = $region40
      $region39: #{tpu_custom_call.1} parent=5 // pred_region
        %s853 = ssub.s32 %s12, 2
        // Predicated region
        $region41: #{tpu_custom_call.1} parent=39 // pred_check
          %p854 = pneg %p114
        $region42: #{tpu_custom_call.1} parent=39 // pred_check_branch
          %856 = sbr.rel (%p854) target = $region44
        $region43: #{tpu_custom_call.1} parent=39 // pred_region
          %s857 = sand.u32 %s99, 1
          %s858 = scalar_lea.sflag [#allocation3], %s857
          %s859 = sand.u32 %s99, 1
          %s860 = smul.addr %s859, 8
          %s861 = scalar_lea.vmem [#allocation2], %s860
          %862 = dma.done %s858, 128
        $region44: #{tpu_custom_call.1} parent=39 // pred_fallthru
          _
      $region40: #{tpu_custom_call.1} parent=5 // pred_fallthru
        _
    $region6: #{tpu_custom_call.1} parent=1 // loop_footer
      %s16 = sadd.s32 1, %s12
    $region7: #{tpu_custom_call.1} parent=1 // loop_footer_branch
      %11 = sbr.rel target = $region3
    $region8: #{tpu_custom_call.1} parent=1 // loop_exit
      _
    %863 = vsyncpa [#allocation3], 1
    %s864 = scalar_lea.sflag [#allocation3], 1
    %865 = vsyncpa %s864, 1

</llo_original>
